<compile_context>
chip_gen: v6e
topology: v6e:2x2x1
jax: 0.10.0
libtpu: 0.0.40
codegen_flags: <defaults>
</compile_context>

<pallas_src>
import functools

import jax
import jax.numpy as jnp
from jax import lax
from jax.experimental import pallas as pl
from jax.experimental.pallas import tpu as pltpu


def _round_up(x, m):
    return ((x + m - 1) // m) * m


def _network_kernel(x_ref, w_ref, b_ref, out_ref, *, n_in_pad, n_out, width):
    x = x_ref[...]                                   # (TB, n_in_pad) bf16

    r1 = n_in_pad
    r2 = n_in_pad + width
    r3 = n_in_pad + 2 * width

    # Static, tile-aligned slices of the packed bf16 weight slab.
    w1 = w_ref[0:r1, :]                              # [c_w1 | a_w1 | 0]
    w2 = w_ref[r1:r2, :]                             # blockdiag(c_w2, a_w2)
    w3 = w_ref[r2:r3, :]                             # [mu_w | sg_w | c_w3 | 0]
    b1 = b_ref[0:1, :]                               # f32 biases
    b2 = b_ref[1:2, :]
    b3 = b_ref[2:3, :]

    # Fused layer 1 + ReLU: lanes = [critic_h | actor_h | 0-pad]
    h = jnp.dot(x, w1, preferred_element_type=jnp.float32) + b1
    h = jnp.maximum(h, 0.0).astype(jnp.bfloat16)
    # Fused layer 2 + ReLU: lanes = [critic_h2 | actor_h2 | 0-pad]
    h = jnp.dot(h, w2, preferred_element_type=jnp.float32) + b2
    h = jnp.maximum(h, 0.0).astype(jnp.bfloat16)
    # Fused heads pre-activation: lanes = [mu | sigma | value | 0-pad]
    y = jnp.dot(h, w3, preferred_element_type=jnp.float32) + b3

    # Per-lane epilogue with a SINGLE transcendental map:
    #   mu lanes    -> tanh(y)
    #   sigma lanes -> sigmoid(y) + 0.001 = 0.5*(tanh(y/2)+1) + 0.001
    #   value/pad   -> identity (pad lanes discarded by the wrapper)
    col = lax.broadcasted_iota(jnp.int32, y.shape, 1)
    is_mu = col < n_out
    t = jnp.tanh(jnp.where(is_mu, y, 0.5 * y))
    out = jnp.where(is_mu, t,
                    jnp.where(col < 2 * n_out, 0.5 * (t + 1.0) + 0.001, y))
    out_ref[...] = out.astype(out_ref.dtype)


@functools.partial(jax.jit, static_argnames=("n_in_pad", "n_out", "width"))
def network_forward(state, packed_w, packed_b, *, n_in_pad, n_out, width):
    """Runs the whole Network forward in a single Pallas kernel.

    state:    (B, num_inputs) float32
    packed_w: packed bf16 weight slab from pack_params
    packed_b: packed f32 bias slab from pack_params
    returns (mu, sigma, value) -- Normal(mu, sigma) params and critic value.
    """
    B, n_in = state.shape

    # Batch tile: amortize ~0.35us/step pipeline overhead with big tiles; for
    # B > 256 keep >=2 grid steps so v7x's two TensorCores both engage.
    B16 = _round_up(B, 16)
    if B16 <= 256:
        TB = B16
    else:
        TB = min(1024, _round_up(pl.cdiv(B16, 2), 16))
    grid_b = pl.cdiv(B16, TB)
    B_full = grid_b * TB

    state = state.astype(jnp.bfloat16)
    pad_rows = B_full - B
    pad_cols = n_in_pad - n_in
    if pad_rows or pad_cols:
        # no-op when B is tile-aligned and num_inputs is already 16-aligned
        state = jnp.pad(state, ((0, pad_rows), (0, pad_cols)))

    kernel = functools.partial(
        _network_kernel, n_in_pad=n_in_pad, n_out=n_out, width=width)

    cost = pl.CostEstimate(
        flops=2 * B_full * width * (n_in_pad + 2 * width),
        transcendentals=B_full * width,
        bytes_accessed=2 * (B_full * n_in_pad + packed_w.size + B_full * width)
                       + 4 * packed_b.size,
    )

    out = pl.pallas_call(
        kernel,
        out_shape=jax.ShapeDtypeStruct((B_full, width), jnp.bfloat16),
        grid=(grid_b,),
        in_specs=[
            pl.BlockSpec((TB, n_in_pad), lambda i: (i, 0)),
            pl.BlockSpec(packed_w.shape, lambda i: (0, 0)),  # VMEM-resident
            pl.BlockSpec(packed_b.shape, lambda i: (0, 0)),  # VMEM-resident
        ],
        out_specs=pl.BlockSpec((TB, width), lambda i: (i, 0)),
        compiler_params=pltpu.CompilerParams(
            dimension_semantics=("parallel",)),
        cost_estimate=cost,
    )(state, packed_w, packed_b)

    out = out[:B].astype(jnp.float32)
    mu = out[:, :n_out]
    sigma = out[:, n_out:2 * n_out]
    value = out[:, 2 * n_out:2 * n_out + 1]
    return mu, sigma, value


def init_params(key, num_inputs, num_outputs, hidden_size=(64, 64)):
    """Deterministic init matching Network.init_weights:
       weight ~ N(0, 0.1), bias = 0.1. Weights stored (in, out)."""
    h0, h1 = hidden_size
    shapes = {
        "c_w1": (num_inputs, h0), "c_w2": (h0, h1), "c_w3": (h1, 1),
        "a_w1": (num_inputs, h0), "a_w2": (h0, h1),
        "mu_w": (h1, num_outputs), "sg_w": (h1, num_outputs),
    }
    params = {}
    keys = jax.random.split(key, len(shapes))
    for k, (name, shp) in zip(keys, sorted(shapes.items())):
        params[name] = 0.1 * jax.random.normal(k, shp, dtype=jnp.float32)
    params["c_b1"] = jnp.full((1, h0), 0.1, jnp.float32)
    params["c_b2"] = jnp.full((1, h1), 0.1, jnp.float32)
    params["c_b3"] = jnp.full((1, 1), 0.1, jnp.float32)
    params["a_b1"] = jnp.full((1, h0), 0.1, jnp.float32)
    params["a_b2"] = jnp.full((1, h1), 0.1, jnp.float32)
    params["mu_b"] = jnp.full((1, num_outputs), 0.1, jnp.float32)
    params["sg_b"] = jnp.full((1, num_outputs), 0.1, jnp.float32)
    return params


def pack_params(p, num_inputs, num_outputs, hidden_size=(64, 64)):
    """Fuses actor/critic/head weights into block-structured 128-lane tiles.

    Returns (packed_w bf16, packed_b f32, meta).  All row offsets inside
    packed_w are multiples of 16 so bf16 sub-slices stay tile-aligned.
    """
    h0, h1 = hidden_size
    n_out = num_outputs
    width = _round_up(max(2 * h0, 2 * h1, 2 * n_out + 1), 128)
    n_in_pad = _round_up(num_inputs, 16)
    assert 2 * n_out + 1 <= width

    # layer 1: columns [critic | actor | pad]
    w1 = jnp.zeros((n_in_pad, width), jnp.float32)
    w1 = w1.at[:num_inputs, 0:h0].set(p["c_w1"])
    w1 = w1.at[:num_inputs, h0:2 * h0].set(p["a_w1"])

    # layer 2: block-diagonal (critic block, actor block)
    w2 = jnp.zeros((width, width), jnp.float32)
    w2 = w2.at[0:h0, 0:h1].set(p["c_w2"])
    w2 = w2.at[h0:2 * h0, h1:2 * h1].set(p["a_w2"])

    # heads: columns [mu | sigma | value | pad]; mu/sigma read actor rows,
    # value reads critic rows.
    w3 = jnp.zeros((width, width), jnp.float32)
    w3 = w3.at[h1:2 * h1, 0:n_out].set(p["mu_w"])
    w3 = w3.at[h1:2 * h1, n_out:2 * n_out].set(p["sg_w"])
    w3 = w3.at[0:h1, 2 * n_out:2 * n_out + 1].set(p["c_w3"])

    packed_w = jnp.concatenate([w1, w2, w3], axis=0).astype(jnp.bfloat16)

    # biases (f32): row 0 = layer-1, row 1 = layer-2, row 2 = heads
    b = jnp.zeros((8, width), jnp.float32)
    b = b.at[0, 0:h0].set(p["c_b1"][0])
    b = b.at[0, h0:2 * h0].set(p["a_b1"][0])
    b = b.at[1, 0:h1].set(p["c_b2"][0])
    b = b.at[1, h1:2 * h1].set(p["a_b2"][0])
    b = b.at[2, 0:n_out].set(p["mu_b"][0])
    b = b.at[2, n_out:2 * n_out].set(p["sg_b"][0])
    b = b.at[2, 2 * n_out].set(p["c_b3"][0, 0])

    return packed_w, b, dict(n_in_pad=n_in_pad, n_out=n_out, width=width)


def _reference_forward(state, p):
    relu = lambda z: jnp.maximum(z, 0.0)
    h = relu(state @ p["c_w1"] + p["c_b1"])
    h = relu(h @ p["c_w2"] + p["c_b2"])
    value = h @ p["c_w3"] + p["c_b3"]
    a = relu(state @ p["a_w1"] + p["a_b1"])
    a = relu(a @ p["a_w2"] + p["a_b2"])
    mu = jnp.tanh(a @ p["mu_w"] + p["mu_b"])
    sigma = jax.nn.sigmoid(a @ p["sg_w"] + p["sg_b"]) + 0.001
    return mu, sigma, value


if __name__ == "__main__":
    key = jax.random.PRNGKey(0)
    k_params, k_state = jax.random.split(key)

    batch = 8
    num_inputs = 32
    num_outputs = 8
    hidden = (64, 64)

    params = init_params(k_params, num_inputs, num_outputs, hidden)
    packed_w, packed_b, meta = pack_params(params, num_inputs, num_outputs, hidden)
    state = jax.random.normal(k_state, (batch, num_inputs), dtype=jnp.float32)

    mu, sigma, value = network_forward(state, packed_w, packed_b, **meta)
    jax.block_until_ready((mu, sigma, value))

    # correctness check against a pure-JAX f32 reference of the same math
    # (tolerance loosened for the bf16 MXU inputs / bf16 output slab)
    mu_r, sg_r, val_r = _reference_forward(state, params)
    assert mu.shape == (batch, num_outputs)
    assert sigma.shape == (batch, num_outputs)
    assert value.shape == (batch, 1)
    assert jnp.allclose(mu, mu_r, atol=3e-2), float(jnp.max(jnp.abs(mu - mu_r)))
    assert jnp.allclose(sigma, sg_r, atol=3e-2), float(jnp.max(jnp.abs(sigma - sg_r)))
    assert jnp.allclose(value, val_r, atol=3e-2), float(jnp.max(jnp.abs(value - val_r)))
    assert bool(jnp.all(sigma > 0.0))

    print("KERNEL_OK")
</pallas_src>

<mosaic_0001>
module attributes {stable_mosaic.version = 11 : i64} {
  func.func @_network_kernel(%arg0: i32, %arg1: memref<16x32xbf16, #tpu.memory_space<vmem>>, %arg2: memref<288x128xbf16, #tpu.memory_space<vmem>>, %arg3: memref<8x128xf32, #tpu.memory_space<vmem>>, %arg4: memref<16x128xbf16, #tpu.memory_space<vmem>>) attributes {dimension_semantics = [#tpu.dimension_semantics<parallel>], iteration_bounds = array<i64: 1>, scalar_prefetch = 0 : i64, scratch_operands = 0 : i64, tpu.core_type = #tpu.core_type<tc>, window_params = [{transform_indices = @transform_0, window_bounds = array<i64: 16, 32>}, {pipeline_mode = #tpu.pipeline_mode<synchronous>, transform_indices = @transform_1, window_bounds = array<i64: 288, 128>}, {pipeline_mode = #tpu.pipeline_mode<synchronous>, transform_indices = @transform_2, window_bounds = array<i64: 8, 128>}, {transform_indices = @transform_3, window_bounds = array<i64: 16, 128>}]} {
    %c0 = arith.constant 0 : index
    %c0_0 = arith.constant 0 : index
    %0 = vector.load %arg1[%c0, %c0_0] : memref<16x32xbf16, #tpu.memory_space<vmem>>, vector<16x32xbf16>
    %c0_1 = arith.constant 0 : index
    %c0_2 = arith.constant 0 : index
    %1 = vector.load %arg2[%c0_1, %c0_2] : memref<288x128xbf16, #tpu.memory_space<vmem>>, vector<32x128xbf16>
    %c32 = arith.constant 32 : index
    %c0_3 = arith.constant 0 : index
    %2 = vector.load %arg2[%c32, %c0_3] : memref<288x128xbf16, #tpu.memory_space<vmem>>, vector<128x128xbf16>
    %c160 = arith.constant 160 : index
    %c0_4 = arith.constant 0 : index
    %3 = vector.load %arg2[%c160, %c0_4] : memref<288x128xbf16, #tpu.memory_space<vmem>>, vector<128x128xbf16>
    %c0_5 = arith.constant 0 : index
    %c0_6 = arith.constant 0 : index
    %4 = vector.load %arg3[%c0_5, %c0_6] : memref<8x128xf32, #tpu.memory_space<vmem>>, vector<1x128xf32>
    %c1 = arith.constant 1 : index
    %c0_7 = arith.constant 0 : index
    %5 = vector.load %arg3[%c1, %c0_7] : memref<8x128xf32, #tpu.memory_space<vmem>>, vector<1x128xf32>
    %c2 = arith.constant 2 : index
    %c0_8 = arith.constant 0 : index
    %6 = vector.load %arg3[%c2, %c0_8] : memref<8x128xf32, #tpu.memory_space<vmem>>, vector<1x128xf32>
    %cst = arith.constant dense<0.000000e+00> : vector<16x128xf32>
    %7 = tpu.matmul %0, %1, %cst {dimension_numbers = #tpu.dot_dimension_numbers<[1], [0], [0], [1], [0, 0, 1, 1], [], []>} : vector<16x32xbf16>, vector<32x128xbf16>, vector<16x128xf32> -> vector<16x128xf32>
    %8 = vector.broadcast %4 : vector<1x128xf32> to vector<16x128xf32>
    %9 = arith.addf %7, %8 : vector<16x128xf32>
    %cst_9 = arith.constant 0.000000e+00 : f32
    %10 = vector.broadcast %cst_9 : f32 to vector<16x128xf32>
    %11 = arith.maximumf %9, %10 : vector<16x128xf32>
    %12 = arith.truncf %11 : vector<16x128xf32> to vector<16x128xbf16>
    %cst_10 = arith.constant dense<0.000000e+00> : vector<16x128xf32>
    %13 = tpu.matmul %12, %2, %cst_10 {dimension_numbers = #tpu.dot_dimension_numbers<[1], [0], [0], [1], [0, 0, 1, 1], [], []>} : vector<16x128xbf16>, vector<128x128xbf16>, vector<16x128xf32> -> vector<16x128xf32>
    %14 = vector.broadcast %5 : vector<1x128xf32> to vector<16x128xf32>
    %15 = arith.addf %13, %14 : vector<16x128xf32>
    %cst_11 = arith.constant 0.000000e+00 : f32
    %16 = vector.broadcast %cst_11 : f32 to vector<16x128xf32>
    %17 = arith.maximumf %15, %16 : vector<16x128xf32>
    %18 = arith.truncf %17 : vector<16x128xf32> to vector<16x128xbf16>
    %cst_12 = arith.constant dense<0.000000e+00> : vector<16x128xf32>
    %19 = tpu.matmul %18, %3, %cst_12 {dimension_numbers = #tpu.dot_dimension_numbers<[1], [0], [0], [1], [0, 0, 1, 1], [], []>} : vector<16x128xbf16>, vector<128x128xbf16>, vector<16x128xf32> -> vector<16x128xf32>
    %20 = vector.broadcast %6 : vector<1x128xf32> to vector<16x128xf32>
    %21 = arith.addf %19, %20 : vector<16x128xf32>
    %22 = tpu.iota {dimensions = array<i32: 1>} : vector<16x128xi32>
    %c8_i32 = arith.constant 8 : i32
    %23 = vector.broadcast %c8_i32 : i32 to vector<16x128xi32>
    %24 = arith.cmpi slt, %22, %23 : vector<16x128xi32>
    %cst_13 = arith.constant 5.000000e-01 : f32
    %25 = vector.broadcast %cst_13 : f32 to vector<16x128xf32>
    %26 = arith.mulf %25, %21 : vector<16x128xf32>
    %27 = arith.select %24, %21, %26 : vector<16x128xi1>, vector<16x128xf32>
    %28 = math.tanh %27 : vector<16x128xf32>
    %c16_i32 = arith.constant 16 : i32
    %29 = vector.broadcast %c16_i32 : i32 to vector<16x128xi32>
    %30 = arith.cmpi slt, %22, %29 : vector<16x128xi32>
    %cst_14 = arith.constant 1.000000e+00 : f32
    %31 = vector.broadcast %cst_14 : f32 to vector<16x128xf32>
    %32 = arith.addf %28, %31 : vector<16x128xf32>
    %cst_15 = arith.constant 5.000000e-01 : f32
    %33 = vector.broadcast %cst_15 : f32 to vector<16x128xf32>
    %34 = arith.mulf %33, %32 : vector<16x128xf32>
    %cst_16 = arith.constant 1.000000e-03 : f32
    %35 = vector.broadcast %cst_16 : f32 to vector<16x128xf32>
    %36 = arith.addf %34, %35 : vector<16x128xf32>
    %37 = arith.select %30, %36, %21 : vector<16x128xi1>, vector<16x128xf32>
    %38 = arith.select %24, %28, %37 : vector<16x128xi1>, vector<16x128xf32>
    %39 = arith.truncf %38 : vector<16x128xf32> to vector<16x128xbf16>
    %c0_17 = arith.constant 0 : index
    %c0_18 = arith.constant 0 : index
    %40 = vector.load %arg4[%c0_17, %c0_18] : memref<16x128xbf16, #tpu.memory_space<vmem>>, vector<16x128xbf16>
    tpu.vector_store %arg4[%c0_17, %c0_18], %39 {strides = array<i32>} : memref<16x128xbf16, #tpu.memory_space<vmem>>, vector<16x128xbf16>,
    return
  }
  func.func @transform_0(%arg0: i32) -> (i32, i32) {
    %c0_i32 = arith.constant 0 : i32
    %c0_i32_0 = arith.constant 0 : i32
    return %arg0, %c0_i32 : i32, i32
  }
  func.func @transform_1(%arg0: i32) -> (i32, i32) {
    %c0_i32 = arith.constant 0 : i32
    %c0_i32_0 = arith.constant 0 : i32
    %c0_i32_1 = arith.constant 0 : i32
    return %c0_i32, %c0_i32_0 : i32, i32
  }
  func.func @transform_2(%arg0: i32) -> (i32, i32) {
    %c0_i32 = arith.constant 0 : i32
    %c0_i32_0 = arith.constant 0 : i32
    %c0_i32_1 = arith.constant 0 : i32
    return %c0_i32, %c0_i32_0 : i32, i32
  }
  func.func @transform_3(%arg0: i32) -> (i32, i32) {
    %c0_i32 = arith.constant 0 : i32
    %c0_i32_0 = arith.constant 0 : i32
    return %arg0, %c0_i32 : i32, i32
  }
}

</mosaic_0001>

<llo_original>
// kernel: network_forward.1
$region0: #{network_forward.1}
  #allocation0 [shape = 'u32[]', space=smem, size = 0x4, offset = 0x4, fixed_abs, tag = 'smem constant byte address 0x4 - core index']
  #allocation1 [shape = 'u32[144,128]{1,0:T(1,128)}', space=vmem, size = 0x12000, scoped, tag = 'internal scratch']
  %s0 = inlined_call_operand.vmem [shape: bf16[16,32], index: 0, kind: input, shape index: {}]
  %s1 = inlined_call_operand.hbm [shape: bf16[288,128], index: 1, kind: input, shape index: {}]
  %s2 = inlined_call_operand.vmem [shape: f32[8,128], index: 2, kind: input, shape index: {}]
  %s3 = inlined_call_operand.vmem [shape: bf16[16,128], index: 3, kind: output, shape index: {}]
  %s4 = sld [smem:[#allocation0]]
  $region26: #{network_forward.1} parent=0
    _
  %s6 = ssub.s32 1, %s4
  %s7 = scalar_select 0, %s6, %s4
  $region1: #{network_forward.1} parent=0
    #allocation2 [shape = 'u8[73728]{0}', space=vmem, size = 0x12000, scoped, tag = 'input window, operand 1, single buffered']
    #allocation3 [shape = 's32[1]{0}', space=sflag, size = 0x4, scoped, tag = 'scoped memory for network_forward.1']
    %8 = vsyncpa [#allocation3], 0
    // Predicated region
    $region2: #{network_forward.1} parent=1 // pred_check
      _
    $region3: #{network_forward.1} parent=1 // pred_check_branch
      %10 = sbr.rel (0) target = $region5
    $region4: #{network_forward.1} parent=1 // pred_region
      _
    $region5: #{network_forward.1} parent=1 // pred_fallthru
      _
    // Predicated region
    $region6: #{network_forward.1} parent=1 // pred_check
      _
    $region7: #{network_forward.1} parent=1 // pred_check_branch
      %12 = sbr.rel (0) target = $region9
    $region8: #{network_forward.1} parent=1 // pred_region
      %s14 = ssub.s32 2304, 2304
      %15 = vsyncadd [#allocation3], %s14
      %s16 = sshll.u32 [#allocation2], 4
      %s17 = int_to_ptr.vmem [resolvable:$true] %s16
      %22 = dma.hbm_to_vmem [thread:$0]  %s1, 2304, %s17, [#allocation3], 64, 64, 4
    $region9: #{network_forward.1} parent=1 // pred_fallthru
      _
    // Predicated region
    $region10: #{network_forward.1} parent=1 // pred_check
      _
    $region11: #{network_forward.1} parent=1 // pred_check_branch
      %24 = sbr.rel (0) target = $region13
    $region12: #{network_forward.1} parent=1 // pred_region
      _
    $region13: #{network_forward.1} parent=1 // pred_fallthru
      _
    // Predicated region
    $region14: #{network_forward.1} parent=1 // pred_check
      _
    $region15: #{network_forward.1} parent=1 // pred_check_branch
      %26 = sbr.rel (0) target = $region17
    $region16: #{network_forward.1} parent=1 // pred_region
      %27 = dma.done [#allocation3], 2304
    $region17: #{network_forward.1} parent=1 // pred_fallthru
      _
    %v29 = vld [vmem:[%s0] sm:$0xf]
    %v30 = vld [vmem:[%s0 + $0x4] sm:$0xf]
    %v31 = vld [vmem:[#allocation2] sm:$0xf]
    %v32 = vld [vmem:[#allocation2 + $0x4] sm:$0xf]
    %v33 = vld [vmem:[#allocation2 + $0x8] sm:$0xf]
    %v34 = vld [vmem:[#allocation2 + $0xc] sm:$0xf]
    %v35 = vld [vmem:[#allocation2 + $0x10] sm:$0xf]
    %v36 = vld [vmem:[#allocation2 + $0x14] sm:$0xf]
    %v37 = vld [vmem:[#allocation2 + $0x18] sm:$0xf]
    %v38 = vld [vmem:[#allocation2 + $0x1c] sm:$0xf]
    %v39 = vld [vmem:[#allocation2 + $0x20] sm:$0xf]
    %v40 = vld [vmem:[#allocation2 + $0x24] sm:$0xf]
    %v41 = vld [vmem:[#allocation2 + $0x28] sm:$0xf]
    %v42 = vld [vmem:[#allocation2 + $0x2c] sm:$0xf]
    %v43 = vld [vmem:[#allocation2 + $0x30] sm:$0xf]
    %v44 = vld [vmem:[#allocation2 + $0x34] sm:$0xf]
    %v45 = vld [vmem:[#allocation2 + $0x38] sm:$0xf]
    %v46 = vld [vmem:[#allocation2 + $0x3c] sm:$0xf]
    %v47 = vld [vmem:[#allocation2 + $0x40] sm:$0xf]
    %v48 = vld [vmem:[#allocation2 + $0x44] sm:$0xf]
    %v49 = vld [vmem:[#allocation2 + $0x48] sm:$0xf]
    %v50 = vld [vmem:[#allocation2 + $0x4c] sm:$0xf]
    %v51 = vld [vmem:[#allocation2 + $0x50] sm:$0xf]
    %v52 = vld [vmem:[#allocation2 + $0x54] sm:$0xf]
    %v53 = vld [vmem:[#allocation2 + $0x58] sm:$0xf]
    %v54 = vld [vmem:[#allocation2 + $0x5c] sm:$0xf]
    %v55 = vld [vmem:[#allocation2 + $0x60] sm:$0xf]
    %v56 = vld [vmem:[#allocation2 + $0x64] sm:$0xf]
    %v57 = vld [vmem:[#allocation2 + $0x68] sm:$0xf]
    %v58 = vld [vmem:[#allocation2 + $0x6c] sm:$0xf]
    %v59 = vld [vmem:[#allocation2 + $0x70] sm:$0xf]
    %v60 = vld [vmem:[#allocation2 + $0x74] sm:$0xf]
    %v61 = vld [vmem:[#allocation2 + $0x78] sm:$0xf]
    %v62 = vld [vmem:[#allocation2 + $0x7c] sm:$0xf]
    %v63 = vld [vmem:[#allocation2 + $0x80] sm:$0xf]
    %v64 = vld [vmem:[#allocation2 + $0x84] sm:$0xf]
    %v65 = vld [vmem:[#allocation2 + $0x88] sm:$0xf]
    %v66 = vld [vmem:[#allocation2 + $0x8c] sm:$0xf]
    %v67 = vld [vmem:[%s2] sm:$0x1]
    %v68 = vld [vmem:[%s2 + $0x1] sm:$0x1]
    %v69 = vld [vmem:[%s2 + $0x2] sm:$0x1]
    %v70 = vlaneseq
    %v71 = vshrl.u32 %v70, 7
    %v72 = vsub.s32 0, %v71
    %v73 = vrot.slane %v67, %v72
    %v76 = vunpack.c.l.b16 %v29
    %v77 = vunpack.c.l.b16 %v30
    %v78 = vpack.c.b16 %v77, %v76
    %v83 = vunpack.c.l.b16 %v31
    %v84 = vunpack.c.l.b16 %v32
    %v85 = vunpack.c.l.b16 %v33
    %v86 = vunpack.c.l.b16 %v34
    %v87 = vpack.c.b16 %v84, %v83
    %v88 = vpack.c.b16 %v86, %v85
    %vm91 = vcmask 261120
    %v93 = vsel %vm91, %v78, 0
    %95 = vmatprep.subr.bf16.mxu0 0
    %96 = vmatpush1.bf16.msra.mxu0 0
    %97 = vmatprep.subr.bf16.mxu0 0
    %98 = vmatpush1.bf16.msra.mxu0 0
    %99 = vmatprep.subr.bf16.mxu0 0
    %100 = vmatpush1.bf16.msra.mxu0 0
    %101 = vmatprep.subr.bf16.mxu0 0
    %102 = vmatpush1.bf16.msra.mxu0 0
    %103 = vmatprep.subr.bf16.mxu0 0
    %104 = vmatpush1.bf16.msra.mxu0 0
    %105 = vmatprep.subr.bf16.mxu0 0
    %106 = vmatpush1.bf16.msra.mxu0 0
    %107 = vmatprep.subr.bf16.mxu0 0
    %108 = vmatpush1.bf16.msra.mxu0 %v88
    %109 = vmatprep.subr.bf16.mxu0 0
    %110 = vmatpush1.bf16.msra.mxu0 %v87
    %111 = vmatprep.subr.bf16.mxu0 0
    %112 = vmatpush2.bf16.msra.mxu0 0
    %113 = vmatprep.subr.bf16.mxu0 0
    %114 = vmatpush2.bf16.msra.mxu0 0
    %115 = vmatprep.subr.bf16.mxu0 0
    %116 = vmatpush2.bf16.msra.mxu0 0
    %117 = vmatprep.subr.bf16.mxu0 0
    %118 = vmatpush2.bf16.msra.mxu0 0
    %119 = vmatprep.subr.bf16.mxu0 0
    %120 = vmatpush2.bf16.msra.mxu0 0
    %121 = vmatprep.subr.bf16.mxu0 0
    %122 = vmatpush2.bf16.msra.mxu0 0
    %123 = vmatprep.subr.bf16.mxu0 0
    %124 = vmatpush2.bf16.msra.mxu0 0
    %125 = vmatprep.subr.bf16.mxu0 0
    %126 = vmatpush2.bf16.msra.mxu0 0
    %127 = vmatprep.mubr.bf16.mxu0 0
    %128 = vmatmul.mubr.bf16.gmra.mxu0 %v93
    %v129 = vpop.f32.mrf.mxu0
    %v130 = vadd.f32 %v73, %v129
    %v131 = vpop.f32.mrf.mxu0
    %v132 = vpop.f32.mrf.mxu0
    %v133 = vadd.f32 %v73, %v132
    %v134 = vpop.f32.mrf.mxu0
    %135 = vdwg.mxu0
    %v136 = vmax.f32 %v130, 0.0
    %v137 = vmax.f32 %v133, 0.0
    %v138 = vpack.c.bf16 %v137, %v136
    %v139 = vlaneseq
    %v140 = vshrl.u32 %v139, 7
    %v141 = vsub.s32 0, %v140
    %v142 = vrot.slane %v68, %v141
    %v159 = vunpack.c.l.b16 %v35
    %v160 = vunpack.c.l.b16 %v36
    %v161 = vunpack.c.l.b16 %v37
    %v162 = vunpack.c.l.b16 %v38
    %v163 = vunpack.c.l.b16 %v39
    %v164 = vunpack.c.l.b16 %v40
    %v165 = vunpack.c.l.b16 %v41
    %v166 = vunpack.c.l.b16 %v42
    %v167 = vunpack.c.l.b16 %v43
    %v168 = vunpack.c.l.b16 %v44
    %v169 = vunpack.c.l.b16 %v45
    %v170 = vunpack.c.l.b16 %v46
    %v171 = vunpack.c.l.b16 %v47
    %v172 = vunpack.c.l.b16 %v48
    %v173 = vunpack.c.l.b16 %v49
    %v174 = vunpack.c.l.b16 %v50
    %v175 = vpack.c.b16 %v160, %v159
    %v176 = vpack.c.b16 %v162, %v161
    %v177 = vpack.c.b16 %v164, %v163
    %v178 = vpack.c.b16 %v166, %v165
    %v179 = vpack.c.b16 %v168, %v167
    %v180 = vpack.c.b16 %v170, %v169
    %v181 = vpack.c.b16 %v172, %v171
    %v182 = vpack.c.b16 %v174, %v173
    %191 = vmatprep.subr.bf16.mxu0 0
    %192 = vmatpush1.bf16.msra.mxu0 %v182
    %193 = vmatprep.subr.bf16.mxu0 0
    %194 = vmatpush1.bf16.msra.mxu0 %v181
    %195 = vmatprep.subr.bf16.mxu0 0
    %196 = vmatpush1.bf16.msra.mxu0 %v180
    %197 = vmatprep.subr.bf16.mxu0 0
    %198 = vmatpush1.bf16.msra.mxu0 %v179
    %199 = vmatprep.subr.bf16.mxu0 0
    %200 = vmatpush1.bf16.msra.mxu0 %v178
    %201 = vmatprep.subr.bf16.mxu0 0
    %202 = vmatpush1.bf16.msra.mxu0 %v177
    %203 = vmatprep.subr.bf16.mxu0 0
    %204 = vmatpush1.bf16.msra.mxu0 %v176
    %205 = vmatprep.subr.bf16.mxu0 0
    %206 = vmatpush1.bf16.msra.mxu0 %v175
    %207 = vmatprep.subr.bf16.mxu0 0
    %208 = vmatpush2.bf16.msra.mxu0 0
    %209 = vmatprep.subr.bf16.mxu0 0
    %210 = vmatpush2.bf16.msra.mxu0 0
    %211 = vmatprep.subr.bf16.mxu0 0
    %212 = vmatpush2.bf16.msra.mxu0 0
    %213 = vmatprep.subr.bf16.mxu0 0
    %214 = vmatpush2.bf16.msra.mxu0 0
    %215 = vmatprep.subr.bf16.mxu0 0
    %216 = vmatpush2.bf16.msra.mxu0 0
    %217 = vmatprep.subr.bf16.mxu0 0
    %218 = vmatpush2.bf16.msra.mxu0 0
    %219 = vmatprep.subr.bf16.mxu0 0
    %220 = vmatpush2.bf16.msra.mxu0 0
    %221 = vmatprep.subr.bf16.mxu0 0
    %222 = vmatpush2.bf16.msra.mxu0 0
    %223 = vmatprep.mubr.bf16.mxu0 0
    %224 = vmatmul.mubr.bf16.gmra.mxu0 %v138
    %v225 = vpop.f32.mrf.mxu0
    %v226 = vadd.f32 %v142, %v225
    %v227 = vpop.f32.mrf.mxu0
    %v228 = vpop.f32.mrf.mxu0
    %v229 = vadd.f32 %v142, %v228
    %v230 = vpop.f32.mrf.mxu0
    %231 = vdwg.mxu0
    %v232 = vmax.f32 %v226, 0.0
    %v233 = vmax.f32 %v229, 0.0
    %v234 = vpack.c.bf16 %v233, %v232
    %v235 = vlaneseq
    %v236 = vshrl.u32 %v235, 7
    %v237 = vsub.s32 0, %v236
    %v238 = vrot.slane %v69, %v237
    %v255 = vunpack.c.l.b16 %v51
    %v256 = vunpack.c.l.b16 %v52
    %v257 = vunpack.c.l.b16 %v53
    %v258 = vunpack.c.l.b16 %v54
    %v259 = vunpack.c.l.b16 %v55
    %v260 = vunpack.c.l.b16 %v56
    %v261 = vunpack.c.l.b16 %v57
    %v262 = vunpack.c.l.b16 %v58
    %v263 = vunpack.c.l.b16 %v59
    %v264 = vunpack.c.l.b16 %v60
    %v265 = vunpack.c.l.b16 %v61
    %v266 = vunpack.c.l.b16 %v62
    %v267 = vunpack.c.l.b16 %v63
    %v268 = vunpack.c.l.b16 %v64
    %v269 = vunpack.c.l.b16 %v65
    %v270 = vunpack.c.l.b16 %v66
    %v271 = vpack.c.b16 %v256, %v255
    %v272 = vpack.c.b16 %v258, %v257
    %v273 = vpack.c.b16 %v260, %v259
    %v274 = vpack.c.b16 %v262, %v261
    %v275 = vpack.c.b16 %v264, %v263
    %v276 = vpack.c.b16 %v266, %v265
    %v277 = vpack.c.b16 %v268, %v267
    %v278 = vpack.c.b16 %v270, %v269
    %287 = vmatprep.subr.bf16.mxu0 0
    %288 = vmatpush1.bf16.msra.mxu0 %v278
    %289 = vmatprep.subr.bf16.mxu0 0
    %290 = vmatpush1.bf16.msra.mxu0 %v277
    %291 = vmatprep.subr.bf16.mxu0 0
    %292 = vmatpush1.bf16.msra.mxu0 %v276
    %293 = vmatprep.subr.bf16.mxu0 0
    %294 = vmatpush1.bf16.msra.mxu0 %v275
    %295 = vmatprep.subr.bf16.mxu0 0
    %296 = vmatpush1.bf16.msra.mxu0 %v274
    %297 = vmatprep.subr.bf16.mxu0 0
    %298 = vmatpush1.bf16.msra.mxu0 %v273
    %299 = vmatprep.subr.bf16.mxu0 0
    %300 = vmatpush1.bf16.msra.mxu0 %v272
    %301 = vmatprep.subr.bf16.mxu0 0
    %302 = vmatpush1.bf16.msra.mxu0 %v271
    %303 = vmatprep.subr.bf16.mxu0 0
    %304 = vmatpush2.bf16.msra.mxu0 0
    %305 = vmatprep.subr.bf16.mxu0 0
    %306 = vmatpush2.bf16.msra.mxu0 0
    %307 = vmatprep.subr.bf16.mxu0 0
    %308 = vmatpush2.bf16.msra.mxu0 0
    %309 = vmatprep.subr.bf16.mxu0 0
    %310 = vmatpush2.bf16.msra.mxu0 0
    %311 = vmatprep.subr.bf16.mxu0 0
    %312 = vmatpush2.bf16.msra.mxu0 0
    %313 = vmatprep.subr.bf16.mxu0 0
    %314 = vmatpush2.bf16.msra.mxu0 0
    %315 = vmatprep.subr.bf16.mxu0 0
    %316 = vmatpush2.bf16.msra.mxu0 0
    %317 = vmatprep.subr.bf16.mxu0 0
    %318 = vmatpush2.bf16.msra.mxu0 0
    %319 = vmatprep.mubr.bf16.mxu0 0
    %320 = vmatmul.mubr.bf16.gmra.mxu0 %v234
    %v321 = vpop.f32.mrf.mxu0
    %v322 = vadd.f32 %v238, %v321
    %v323 = vpop.f32.mrf.mxu0
    %v324 = vpop.f32.mrf.mxu0
    %v325 = vadd.f32 %v238, %v324
    %v326 = vpop.f32.mrf.mxu0
    %327 = vdwg.mxu0
    %v328 = vlaneseq
    %v329 = vand.u32 %v328, 127
    %vm330 = vcmp.lt.s32.totalorder %v329, 8
    %v331 = vmul.f32 %v322, 0.5
    %v332 = vmul.f32 %v325, 0.5
    %v333 = vsel %vm330, %v322, %v331
    %v334 = vsel %vm330, %v325, %v332
    %v335 = vtanh.pop %v333
    %v336 = vtanh.pop %v334
    %vm337 = vcmp.lt.s32.totalorder %v329, 16
    %v338 = vadd.f32 %v335, 1.0
    %v339 = vadd.f32 %v336, 1.0
    %v340 = vmul.f32 %v338, 0.5
    %v341 = vmul.f32 %v339, 0.5
    %v342 = vadd.f32 %v340, 0.001
    %v343 = vadd.f32 %v341, 0.001
    %v344 = vsel %vm337, %v342, %v322
    %v345 = vsel %vm337, %v343, %v325
    %v346 = vsel %vm330, %v335, %v344
    %v347 = vsel %vm330, %v336, %v345
    %v348 = vpack.c.bf16 %v347, %v346
    %v350 = vunpack.c.l.b16 %v348
    %v351 = vunpack.c.h.b16 %v348
    %v352 = vpack.c.b16 %v350, %v350
    %v353 = vpack.c.b16 %v351, %v351
    %356 = vst [vmem:[%s3] sm:$0xf] %v352
    %357 = vst [vmem:[%s3 + $0x4] sm:$0xf] %v353
    // Predicated region
    $region18: #{network_forward.1} parent=1 // pred_check
      _
    $region19: #{network_forward.1} parent=1 // pred_check_branch
      %359 = sbr.rel (0) target = $region21
    $region20: #{network_forward.1} parent=1 // pred_region
      _
    $region21: #{network_forward.1} parent=1 // pred_fallthru
      _
    // Predicated region
    $region22: #{network_forward.1} parent=1 // pred_check
      _
    $region23: #{network_forward.1} parent=1 // pred_check_branch
      %361 = sbr.rel (0) target = $region25
    $region24: #{network_forward.1} parent=1 // pred_region
      _
    $region25: #{network_forward.1} parent=1 // pred_fallthru
      _
    %362 = vsyncpa [#allocation3], 1

</llo_original>
